<compile_context>
chip_gen: v5e
topology: v5e:2x2
jax: 0.10.0
libtpu: 0.0.40
codegen_flags: <defaults>
</compile_context>

<pallas_src>
import numpy as np

import jax
import jax.numpy as jnp
from jax.experimental import pallas as pl
from jax.experimental.pallas import tpu as pltpu

BN_EPS = 1e-5
LANE = 128
SUBLANE = 8
NEG_BIG = -1e30  # f32 bias for padded logit lanes -> exp() underflows to exactly 0


def _round_up(n, m):
    return ((n + m - 1) // m) * m


def _cdiv(a, b):
    return -(-a // b)


def _pad2(a, rows, cols, fill=0.0):
    r, c = a.shape
    return jnp.pad(a, ((0, rows - r), (0, cols - c)), constant_values=fill)


def autodis_kernel(x_ref, w1_ref, b1_ref, w2_ref, b2_ref, wo_ref, bo_ref,
                   meta_ref, out_ref):
    """Fused MLP (BN / temperature pre-folded) -> softmax -> meta-prompt matmul."""
    wdt = w1_ref.dtype
    x = x_ref[...].astype(wdt)

    # hidden layer 1: Linear (eval-mode BN folded in) -> ReLU   (Dropout = identity in eval)
    h = jnp.dot(x, w1_ref[...], preferred_element_type=jnp.float32) + b1_ref[...]
    h = jnp.maximum(h, 0.0)

    # hidden layer 2: Linear (eval-mode BN folded in) -> ReLU
    h = jnp.dot(h.astype(wdt), w2_ref[...], preferred_element_type=jnp.float32) + b2_ref[...]
    h = jnp.maximum(h, 0.0)

    # output layer: 1/temperature folded into wo/bo; padded lanes carry a -1e30 f32 bias
    logits = jnp.dot(h.astype(wdt), wo_ref[...], preferred_element_type=jnp.float32) + bo_ref[...]

    # online-stable softmax numerator; padded lanes give exp(-1e30 - m) == 0 exactly
    m = jnp.max(logits, axis=1, keepdims=True)
    e = jnp.exp(logits - m)
    denom = jnp.sum(e, axis=1, keepdims=True)

    # meta-prompt matmul on the UNnormalized numerator, then one (tb, din)-sized exact divide.
    # Padded meta rows are zero, so they contribute nothing.
    acc = jnp.dot(e.astype(meta_ref.dtype), meta_ref[...],
                  preferred_element_type=jnp.float32)
    out_ref[...] = (acc / denom).astype(out_ref.dtype)


def _fold_and_pad_params(params, temperature, input_dim, weights_dtype, pad_io):
    """Fold eval-mode BN + 1/temperature into the Linears; pad internal dims to 128 lanes."""
    e1 = params["w1"].shape[1]
    e2 = params["w2"].shape[1]
    number = params["wo"].shape[1]

    # x/out are streamed: keep their feature width at the true size unless pad_io is requested.
    din_used = _round_up(input_dim, LANE) if pad_io else input_dim
    e1_p = _round_up(e1, LANE)
    e2_p = _round_up(e2, LANE)
    num_p = _round_up(number, LANE)

    # Fold eval-mode BatchNorm into the preceding Linear (all folding done in f32):
    #   w' = w * g*rsqrt(v+eps),   b' = (b - m) * g*rsqrt(v+eps) + beta
    s1 = params["g1"] * jax.lax.rsqrt(params["v1"] + BN_EPS)
    w1 = params["w1"] * s1
    b1 = (params["b1"] - params["m1"]) * s1 + params["be1"]
    s2 = params["g2"] * jax.lax.rsqrt(params["v2"] + BN_EPS)
    w2 = params["w2"] * s2
    b2 = (params["b2"] - params["m2"]) * s2 + params["be2"]

    # Fold 1/temperature into the output Linear.
    inv_t = 1.0 / float(temperature)
    wo = params["wo"] * inv_t
    bo = params["bo"] * inv_t

    folded = dict(
        w1=_pad2(w1, din_used, e1_p).astype(weights_dtype),
        b1=_pad2(b1, 1, e1_p),                                # biases stay f32
        w2=_pad2(w2, e1_p, e2_p).astype(weights_dtype),
        b2=_pad2(b2, 1, e2_p),
        wo=_pad2(wo, e2_p, num_p).astype(weights_dtype),
        bo=_pad2(bo, 1, num_p, fill=NEG_BIG),                 # kill padded softmax lanes
        meta=_pad2(params["meta"], num_p, din_used).astype(weights_dtype),
    )
    return folded, (din_used, e1_p, e2_p, num_p)


def _pick_batch_tile(B, block_b):
    """Batch tile: <= block_b rows, multiple of 8, minimal padding, even >=2-step grid when
    the batch is big enough (so both v7x TensorCores get work; no-op on 1-TC v5e/v6e)."""
    rows = _round_up(B, SUBLANE)
    steps = _cdiv(rows, min(block_b, rows))
    if steps == 1 and rows >= 512:
        steps = 2                      # split a single big tile across the two v7x TCs
    elif steps > 1 and steps % 2 == 1:
        steps += 1                     # even step count -> balanced 2-TC split
    return _round_up(_cdiv(B, steps), SUBLANE)


def autodis_domain_forward(x, params, temperature, *, block_b=512,
                           weights_dtype=jnp.bfloat16, out_dtype=None, pad_io=False):
    """x: (B, input_dim). Returns (B, input_dim) in `out_dtype` (default: x.dtype).

    Eval/inference semantics only (BatchNorm running stats folded into the Linears; Dropout is
    the identity). x is streamed at its incoming dtype: pass bf16 x (and keep the default bf16
    weights) to halve the HBM stream on all generations; accumulation is always f32.
    """
    B, input_dim = x.shape
    out_dtype = x.dtype if out_dtype is None else out_dtype

    folded, (din_used, e1_p, e2_p, num_p) = _fold_and_pad_params(
        params, temperature, input_dim, weights_dtype, pad_io)

    tb = _pick_batch_tile(B, block_b)
    b_p = _round_up(B, tb)
    grid = (b_p // tb,)

    # Skip the wrapper-side pad (an extra HBM pass) whenever shapes already tile evenly.
    if b_p != B or din_used != input_dim:
        x_p = jnp.pad(x, ((0, b_p - B), (0, din_used - input_dim)))
    else:
        x_p = x

    x_spec = pl.BlockSpec((tb, din_used), lambda i: (i, 0))      # streams over the batch
    out_spec = pl.BlockSpec((tb, din_used), lambda i: (i, 0))

    # Advisory cost model so XLA schedules/overlaps this call inside a larger graph.
    out_itemsize = np.dtype(out_dtype).itemsize
    flops = 2 * b_p * (din_used * e1_p + e1_p * e2_p + e2_p * num_p + num_p * din_used)
    weight_bytes = sum(int(v.size) * v.dtype.itemsize for v in folded.values())
    io_bytes = int(x_p.size) * x_p.dtype.itemsize + b_p * din_used * out_itemsize
    cost = pl.CostEstimate(flops=flops, transcendentals=b_p * num_p,
                           bytes_accessed=weight_bytes + io_bytes)

    # VMEM budget from the actual footprint (lane-padded), clamped to stay inside every
    # generation's physical budget (v7x: 64 MiB per TensorCore).
    def _vmem2d(a_shape, itemsize):
        r, c = a_shape
        return _round_up(r, SUBLANE) * _round_up(c, LANE) * itemsize
    weight_vmem = sum(_vmem2d(v.shape, v.dtype.itemsize) for v in folded.values())
    tile_vmem = (_vmem2d((tb, din_used), x_p.dtype.itemsize)
                 + _vmem2d((tb, din_used), out_itemsize))
    vmem_limit = int(min(max(2 * weight_vmem + 2 * tile_vmem + (4 << 20), 32 << 20), 64 << 20))

    weight_args = (folded["w1"], folded["b1"], folded["w2"], folded["b2"],
                   folded["wo"], folded["bo"], folded["meta"])

    def run(weight_pipeline):
        def resident(shape):   # same block every step -> DMA'd once, stays in VMEM
            if weight_pipeline is None:
                return pl.BlockSpec(shape, lambda i: (0, 0))
            return pl.BlockSpec(shape, lambda i: (0, 0), pipeline_mode=weight_pipeline)

        in_specs = [
            x_spec,
            resident((din_used, e1_p)), resident((1, e1_p)),
            resident((e1_p, e2_p)), resident((1, e2_p)),
            resident((e2_p, num_p)), resident((1, num_p)),
            resident((num_p, din_used)),
        ]
        return pl.pallas_call(
            autodis_kernel,
            out_shape=jax.ShapeDtypeStruct((b_p, din_used), out_dtype),
            grid=grid,
            in_specs=in_specs,
            out_specs=out_spec,
            compiler_params=pltpu.CompilerParams(
                dimension_semantics=("parallel",),   # megacore / 2-TC sharding on v7x
                vmem_limit_bytes=vmem_limit),
            cost_estimate=cost,
        )(x_p, *weight_args)

    try:
        # Single-buffer the resident weights: they never change across grid steps, so this
        # halves their VMEM footprint (decisive on v7x's 64 MiB/TC once embed dims grow).
        out_p = run(pl.Buffered(1))
    except Exception:
        # Fallback for jax versions where pipeline_mode isn't honored by the grid pipeline.
        out_p = run(None)

    return out_p[:B, :input_dim]


def init_params(key, input_dim, embed_dims, number, max_val=0.01):
    """Deterministic synthetic init mirroring the module's parameter shapes."""
    e1, e2 = embed_dims
    ks = jax.random.split(key, 8)

    def lin(kw, kb, fan_in, fan_out):
        bound = 1.0 / jnp.sqrt(fan_in)
        w = jax.random.uniform(kw, (fan_in, fan_out), jnp.float32, -bound, bound)
        b = jax.random.uniform(kb, (1, fan_out), jnp.float32, -bound, bound)
        return w, b

    w1, b1 = lin(ks[0], ks[1], input_dim, e1)
    w2, b2 = lin(ks[2], ks[3], e1, e2)
    wo, bo = lin(ks[4], ks[5], e2, number)

    params = dict(
        w1=w1, b1=b1,
        g1=jnp.ones((1, e1), jnp.float32), be1=jnp.zeros((1, e1), jnp.float32),
        m1=jnp.zeros((1, e1), jnp.float32), v1=jnp.ones((1, e1), jnp.float32),
        w2=w2, b2=b2,
        g2=jnp.ones((1, e2), jnp.float32), be2=jnp.zeros((1, e2), jnp.float32),
        m2=jnp.zeros((1, e2), jnp.float32), v2=jnp.ones((1, e2), jnp.float32),
        wo=wo, bo=bo,
        # PromptDomain.meta_prompt_domain: uniform(-max_val, max_val), shape (number, input_dim)
        meta=jax.random.uniform(ks[6], (number, input_dim), jnp.float32, -max_val, max_val),
    )
    return params


def reference_forward(x, params, temperature):
    """Pure-JAX reference of the same (eval-mode) forward for a sanity check."""
    h = x @ params["w1"] + params["b1"]
    h = (h - params["m1"]) / jnp.sqrt(params["v1"] + BN_EPS) * params["g1"] + params["be1"]
    h = jnp.maximum(h, 0.0)
    h = h @ params["w2"] + params["b2"]
    h = (h - params["m2"]) / jnp.sqrt(params["v2"] + BN_EPS) * params["g2"] + params["be2"]
    h = jnp.maximum(h, 0.0)
    logits = h @ params["wo"] + params["bo"]
    p = jax.nn.softmax(logits / temperature, axis=1)
    return p @ params["meta"]


if __name__ == "__main__":
    # Small shapes consistent with the module's forward: x is (batch, input_dim).
    B = 8
    input_dim = 32
    embed_dims = (64, 32)
    number = 16          # number of meta prompts
    temperature = 0.5
    max_val = 0.01

    key = jax.random.PRNGKey(0)
    kx, kp = jax.random.split(key)
    x = jax.random.normal(kx, (B, input_dim), jnp.float32)
    params = init_params(kp, input_dim, embed_dims, number, max_val=max_val)
    ref = reference_forward(x, params, temperature)

    # 1) f32 weights, true-width streamed x/out (tight check).
    out = jax.block_until_ready(
        autodis_domain_forward(x, params, temperature, weights_dtype=jnp.float32))
    assert out.shape == (B, input_dim) and out.dtype == jnp.float32
    assert jnp.allclose(out, ref, atol=5e-5, rtol=1e-3), "f32 mismatch vs reference"

    # 2) f32 weights, lane-dense-padded x/out streaming (benchmarkable alternative).
    out_pad = jax.block_until_ready(
        autodis_domain_forward(x, params, temperature, weights_dtype=jnp.float32, pad_io=True))
    assert jnp.allclose(out_pad, ref, atol=5e-5, rtol=1e-3), "padded-io mismatch vs reference"

    # 3) default path: bf16 weights + bf16-streamed x/out (looser tolerance for the bf16 casts).
    out_bf16 = jax.block_until_ready(
        autodis_domain_forward(x.astype(jnp.bfloat16), params, temperature))
    assert out_bf16.shape == (B, input_dim) and out_bf16.dtype == jnp.bfloat16
    assert jnp.allclose(out_bf16.astype(jnp.float32), ref, atol=5e-4, rtol=1e-1), \
        "bf16 mismatch vs reference"

    # 4) larger batch: exercises batch padding and the even, multi-step ("parallel") grid.
    B2 = 1040
    x2 = jax.random.normal(jax.random.PRNGKey(1), (B2, input_dim), jnp.float32)
    out2 = jax.block_until_ready(
        autodis_domain_forward(x2, params, temperature, weights_dtype=jnp.float32))
    ref2 = reference_forward(x2, params, temperature)
    assert out2.shape == (B2, input_dim)
    assert jnp.allclose(out2, ref2, atol=5e-5, rtol=1e-3), "multi-tile mismatch vs reference"

    print("KERNEL_OK")
</pallas_src>

<mosaic_0001>
module attributes {stable_mosaic.version = 11 : i64} {
  func.func @autodis_kernel(%arg0: i32, %arg1: memref<8x32xf32, #tpu.memory_space<vmem>>, %arg2: memref<32x128xf32, #tpu.memory_space<vmem>>, %arg3: memref<1x128xf32, #tpu.memory_space<vmem>>, %arg4: memref<128x128xf32, #tpu.memory_space<vmem>>, %arg5: memref<1x128xf32, #tpu.memory_space<vmem>>, %arg6: memref<128x128xf32, #tpu.memory_space<vmem>>, %arg7: memref<1x128xf32, #tpu.memory_space<vmem>>, %arg8: memref<128x32xf32, #tpu.memory_space<vmem>>, %arg9: memref<8x32xf32, #tpu.memory_space<vmem>>) attributes {dimension_semantics = [#tpu.dimension_semantics<parallel>], iteration_bounds = array<i64: 1>, scalar_prefetch = 0 : i64, scratch_operands = 0 : i64, tpu.core_type = #tpu.core_type<tc>, window_params = [{transform_indices = @transform_0, window_bounds = array<i64: 8, 32>}, {pipeline_mode = #tpu.pipeline_mode<synchronous>, transform_indices = @transform_1, window_bounds = array<i64: 32, 128>}, {pipeline_mode = #tpu.pipeline_mode<synchronous>, transform_indices = @transform_2, window_bounds = array<i64: 1, 128>}, {pipeline_mode = #tpu.pipeline_mode<synchronous>, transform_indices = @transform_3, window_bounds = array<i64: 128, 128>}, {pipeline_mode = #tpu.pipeline_mode<synchronous>, transform_indices = @transform_4, window_bounds = array<i64: 1, 128>}, {pipeline_mode = #tpu.pipeline_mode<synchronous>, transform_indices = @transform_5, window_bounds = array<i64: 128, 128>}, {pipeline_mode = #tpu.pipeline_mode<synchronous>, transform_indices = @transform_6, window_bounds = array<i64: 1, 128>}, {pipeline_mode = #tpu.pipeline_mode<synchronous>, transform_indices = @transform_7, window_bounds = array<i64: 128, 32>}, {transform_indices = @transform_8, window_bounds = array<i64: 8, 32>}]} {
    %c0 = arith.constant 0 : index
    %c0_0 = arith.constant 0 : index
    %0 = vector.load %arg1[%c0, %c0_0] : memref<8x32xf32, #tpu.memory_space<vmem>>, vector<8x32xf32>
    %c0_1 = arith.constant 0 : index
    %c0_2 = arith.constant 0 : index
    %1 = vector.load %arg2[%c0_1, %c0_2] : memref<32x128xf32, #tpu.memory_space<vmem>>, vector<32x128xf32>
    %cst = arith.constant dense<0.000000e+00> : vector<8x128xf32>
    %2 = tpu.matmul %0, %1, %cst {dimension_numbers = #tpu.dot_dimension_numbers<[1], [0], [0], [1], [0, 0, 1, 1], [], []>} : vector<8x32xf32>, vector<32x128xf32>, vector<8x128xf32> -> vector<8x128xf32>
    %c0_3 = arith.constant 0 : index
    %c0_4 = arith.constant 0 : index
    %3 = vector.load %arg3[%c0_3, %c0_4] : memref<1x128xf32, #tpu.memory_space<vmem>>, vector<1x128xf32>
    %4 = vector.broadcast %3 : vector<1x128xf32> to vector<8x128xf32>
    %5 = arith.addf %2, %4 : vector<8x128xf32>
    %cst_5 = arith.constant 0.000000e+00 : f32
    %6 = vector.broadcast %cst_5 : f32 to vector<8x128xf32>
    %7 = arith.maximumf %5, %6 : vector<8x128xf32>
    %c0_6 = arith.constant 0 : index
    %c0_7 = arith.constant 0 : index
    %8 = vector.load %arg4[%c0_6, %c0_7] : memref<128x128xf32, #tpu.memory_space<vmem>>, vector<128x128xf32>
    %cst_8 = arith.constant dense<0.000000e+00> : vector<8x128xf32>
    %9 = tpu.matmul %7, %8, %cst_8 {dimension_numbers = #tpu.dot_dimension_numbers<[1], [0], [0], [1], [0, 0, 1, 1], [], []>} : vector<8x128xf32>, vector<128x128xf32>, vector<8x128xf32> -> vector<8x128xf32>
    %c0_9 = arith.constant 0 : index
    %c0_10 = arith.constant 0 : index
    %10 = vector.load %arg5[%c0_9, %c0_10] : memref<1x128xf32, #tpu.memory_space<vmem>>, vector<1x128xf32>
    %11 = vector.broadcast %10 : vector<1x128xf32> to vector<8x128xf32>
    %12 = arith.addf %9, %11 : vector<8x128xf32>
    %cst_11 = arith.constant 0.000000e+00 : f32
    %13 = vector.broadcast %cst_11 : f32 to vector<8x128xf32>
    %14 = arith.maximumf %12, %13 : vector<8x128xf32>
    %c0_12 = arith.constant 0 : index
    %c0_13 = arith.constant 0 : index
    %15 = vector.load %arg6[%c0_12, %c0_13] : memref<128x128xf32, #tpu.memory_space<vmem>>, vector<128x128xf32>
    %cst_14 = arith.constant dense<0.000000e+00> : vector<8x128xf32>
    %16 = tpu.matmul %14, %15, %cst_14 {dimension_numbers = #tpu.dot_dimension_numbers<[1], [0], [0], [1], [0, 0, 1, 1], [], []>} : vector<8x128xf32>, vector<128x128xf32>, vector<8x128xf32> -> vector<8x128xf32>
    %c0_15 = arith.constant 0 : index
    %c0_16 = arith.constant 0 : index
    %17 = vector.load %arg7[%c0_15, %c0_16] : memref<1x128xf32, #tpu.memory_space<vmem>>, vector<1x128xf32>
    %18 = vector.broadcast %17 : vector<1x128xf32> to vector<8x128xf32>
    %19 = arith.addf %16, %18 : vector<8x128xf32>
    %cst_17 = arith.constant dense<0xFF800000> : vector<8xf32>
    %20 = vector.multi_reduction <maximumf>, %19, %cst_17 [1] : vector<8x128xf32> to vector<8xf32>
    %21 = vector.shape_cast %20 : vector<8xf32> to vector<8x1xf32>
    %22 = vector.broadcast %21 : vector<8x1xf32> to vector<8x128xf32>
    %23 = arith.subf %19, %22 : vector<8x128xf32>
    %24 = math.exp %23 : vector<8x128xf32>
    %cst_18 = arith.constant dense<0.000000e+00> : vector<8xf32>
    %25 = vector.multi_reduction <add>, %24, %cst_18 [1] : vector<8x128xf32> to vector<8xf32>
    %26 = vector.shape_cast %25 : vector<8xf32> to vector<8x1xf32>
    %c0_19 = arith.constant 0 : index
    %c0_20 = arith.constant 0 : index
    %27 = vector.load %arg8[%c0_19, %c0_20] : memref<128x32xf32, #tpu.memory_space<vmem>>, vector<128x32xf32>
    %cst_21 = arith.constant dense<0.000000e+00> : vector<8x32xf32>
    %28 = tpu.matmul %24, %27, %cst_21 {dimension_numbers = #tpu.dot_dimension_numbers<[1], [0], [0], [1], [0, 0, 1, 1], [], []>} : vector<8x128xf32>, vector<128x32xf32>, vector<8x32xf32> -> vector<8x32xf32>
    %29 = vector.broadcast %26 : vector<8x1xf32> to vector<8x32xf32>
    %30 = arith.divf %28, %29 : vector<8x32xf32>
    %c0_22 = arith.constant 0 : index
    %c0_23 = arith.constant 0 : index
    %31 = vector.load %arg9[%c0_22, %c0_23] : memref<8x32xf32, #tpu.memory_space<vmem>>, vector<8x32xf32>
    tpu.vector_store %arg9[%c0_22, %c0_23], %30 {strides = array<i32>} : memref<8x32xf32, #tpu.memory_space<vmem>>, vector<8x32xf32>,
    return
  }
  func.func @transform_0(%arg0: i32) -> (i32, i32) {
    %c0_i32 = arith.constant 0 : i32
    %c0_i32_0 = arith.constant 0 : i32
    return %arg0, %c0_i32 : i32, i32
  }
  func.func @transform_1(%arg0: i32) -> (i32, i32) {
    %c0_i32 = arith.constant 0 : i32
    %c0_i32_0 = arith.constant 0 : i32
    %c0_i32_1 = arith.constant 0 : i32
    return %c0_i32, %c0_i32_0 : i32, i32
  }
  func.func @transform_2(%arg0: i32) -> (i32, i32) {
    %c0_i32 = arith.constant 0 : i32
    %c0_i32_0 = arith.constant 0 : i32
    %c0_i32_1 = arith.constant 0 : i32
    return %c0_i32, %c0_i32_0 : i32, i32
  }
  func.func @transform_3(%arg0: i32) -> (i32, i32) {
    %c0_i32 = arith.constant 0 : i32
    %c0_i32_0 = arith.constant 0 : i32
    %c0_i32_1 = arith.constant 0 : i32
    return %c0_i32, %c0_i32_0 : i32, i32
  }
  func.func @transform_4(%arg0: i32) -> (i32, i32) {
    %c0_i32 = arith.constant 0 : i32
    %c0_i32_0 = arith.constant 0 : i32
    %c0_i32_1 = arith.constant 0 : i32
    return %c0_i32, %c0_i32_0 : i32, i32
  }
  func.func @transform_5(%arg0: i32) -> (i32, i32) {
    %c0_i32 = arith.constant 0 : i32
    %c0_i32_0 = arith.constant 0 : i32
    %c0_i32_1 = arith.constant 0 : i32
    return %c0_i32, %c0_i32_0 : i32, i32
  }
  func.func @transform_6(%arg0: i32) -> (i32, i32) {
    %c0_i32 = arith.constant 0 : i32
    %c0_i32_0 = arith.constant 0 : i32
    %c0_i32_1 = arith.constant 0 : i32
    return %c0_i32, %c0_i32_0 : i32, i32
  }
  func.func @transform_7(%arg0: i32) -> (i32, i32) {
    %c0_i32 = arith.constant 0 : i32
    %c0_i32_0 = arith.constant 0 : i32
    %c0_i32_1 = arith.constant 0 : i32
    return %c0_i32, %c0_i32_0 : i32, i32
  }
  func.func @transform_8(%arg0: i32) -> (i32, i32) {
    %c0_i32 = arith.constant 0 : i32
    %c0_i32_0 = arith.constant 0 : i32
    return %arg0, %c0_i32 : i32, i32
  }
}

module attributes {stable_mosaic.version = 11 : i64} {
  func.func @autodis_kernel(%arg0: i32, %arg1: memref<8x32xf32, #tpu.memory_space<vmem>>, %arg2: memref<32x128xf32, #tpu.memory_space<vmem>>, %arg3: memref<1x128xf32, #tpu.memory_space<vmem>>, %arg4: memref<128x128xf32, #tpu.memory_space<vmem>>, %arg5: memref<1x128xf32, #tpu.memory_space<vmem>>, %arg6: memref<128x128xf32, #tpu.memory_space<vmem>>, %arg7: memref<1x128xf32, #tpu.memory_space<vmem>>, %arg8: memref<128x32xf32, #tpu.memory_space<vmem>>, %arg9: memref<8x32xf32, #tpu.memory_space<vmem>>) attributes {dimension_semantics = [#tpu.dimension_semantics<parallel>], iteration_bounds = array<i64: 1>, scalar_prefetch = 0 : i64, scratch_operands = 0 : i64, tpu.core_type = #tpu.core_type<tc>, window_params = [{transform_indices = @transform_0, window_bounds = array<i64: 8, 32>}, {pipeline_mode = #tpu.pipeline_mode<synchronous>, transform_indices = @transform_1, window_bounds = array<i64: 32, 128>}, {pipeline_mode = #tpu.pipeline_mode<synchronous>, transform_indices = @transform_2, window_bounds = array<i64: 1, 128>}, {pipeline_mode = #tpu.pipeline_mode<synchronous>, transform_indices = @transform_3, window_bounds = array<i64: 128, 128>}, {pipeline_mode = #tpu.pipeline_mode<synchronous>, transform_indices = @transform_4, window_bounds = array<i64: 1, 128>}, {pipeline_mode = #tpu.pipeline_mode<synchronous>, transform_indices = @transform_5, window_bounds = array<i64: 128, 128>}, {pipeline_mode = #tpu.pipeline_mode<synchronous>, transform_indices = @transform_6, window_bounds = array<i64: 1, 128>}, {pipeline_mode = #tpu.pipeline_mode<synchronous>, transform_indices = @transform_7, window_bounds = array<i64: 128, 32>}, {transform_indices = @transform_8, window_bounds = array<i64: 8, 32>}]} {
    %c0 = arith.constant 0 : index
    %c0_0 = arith.constant 0 : index
    %0 = vector.load %arg1[%c0, %c0_0] : memref<8x32xf32, #tpu.memory_space<vmem>>, vector<8x32xf32>
    %c0_1 = arith.constant 0 : index
    %c0_2 = arith.constant 0 : index
    %1 = vector.load %arg2[%c0_1, %c0_2] : memref<32x128xf32, #tpu.memory_space<vmem>>, vector<32x128xf32>
    %cst = arith.constant dense<0.000000e+00> : vector<8x128xf32>
    %2 = tpu.matmul %0, %1, %cst {dimension_numbers = #tpu.dot_dimension_numbers<[1], [0], [0], [1], [0, 0, 1, 1], [], []>} : vector<8x32xf32>, vector<32x128xf32>, vector<8x128xf32> -> vector<8x128xf32>
    %c0_3 = arith.constant 0 : index
    %c0_4 = arith.constant 0 : index
    %3 = vector.load %arg3[%c0_3, %c0_4] : memref<1x128xf32, #tpu.memory_space<vmem>>, vector<1x128xf32>
    %4 = vector.broadcast %3 : vector<1x128xf32> to vector<8x128xf32>
    %5 = arith.addf %2, %4 : vector<8x128xf32>
    %cst_5 = arith.constant 0.000000e+00 : f32
    %6 = vector.broadcast %cst_5 : f32 to vector<8x128xf32>
    %7 = arith.maximumf %5, %6 : vector<8x128xf32>
    %c0_6 = arith.constant 0 : index
    %c0_7 = arith.constant 0 : index
    %8 = vector.load %arg4[%c0_6, %c0_7] : memref<128x128xf32, #tpu.memory_space<vmem>>, vector<128x128xf32>
    %cst_8 = arith.constant dense<0.000000e+00> : vector<8x128xf32>
    %9 = tpu.matmul %7, %8, %cst_8 {dimension_numbers = #tpu.dot_dimension_numbers<[1], [0], [0], [1], [0, 0, 1, 1], [], []>} : vector<8x128xf32>, vector<128x128xf32>, vector<8x128xf32> -> vector<8x128xf32>
    %c0_9 = arith.constant 0 : index
    %c0_10 = arith.constant 0 : index
    %10 = vector.load %arg5[%c0_9, %c0_10] : memref<1x128xf32, #tpu.memory_space<vmem>>, vector<1x128xf32>
    %11 = vector.broadcast %10 : vector<1x128xf32> to vector<8x128xf32>
    %12 = arith.addf %9, %11 : vector<8x128xf32>
    %cst_11 = arith.constant 0.000000e+00 : f32
    %13 = vector.broadcast %cst_11 : f32 to vector<8x128xf32>
    %14 = arith.maximumf %12, %13 : vector<8x128xf32>
    %c0_12 = arith.constant 0 : index
    %c0_13 = arith.constant 0 : index
    %15 = vector.load %arg6[%c0_12, %c0_13] : memref<128x128xf32, #tpu.memory_space<vmem>>, vector<128x128xf32>
    %cst_14 = arith.constant dense<0.000000e+00> : vector<8x128xf32>
    %16 = tpu.matmul %14, %15, %cst_14 {dimension_numbers = #tpu.dot_dimension_numbers<[1], [0], [0], [1], [0, 0, 1, 1], [], []>} : vector<8x128xf32>, vector<128x128xf32>, vector<8x128xf32> -> vector<8x128xf32>
    %c0_15 = arith.constant 0 : index
    %c0_16 = arith.constant 0 : index
    %17 = vector.load %arg7[%c0_15, %c0_16] : memref<1x128xf32, #tpu.memory_space<vmem>>, vector<1x128xf32>
    %18 = vector.broadcast %17 : vector<1x128xf32> to vector<8x128xf32>
    %19 = arith.addf %16, %18 : vector<8x128xf32>
    %cst_17 = arith.constant dense<0xFF800000> : vector<8xf32>
    %20 = vector.multi_reduction <maximumf>, %19, %cst_17 [1] : vector<8x128xf32> to vector<8xf32>
    %21 = vector.shape_cast %20 : vector<8xf32> to vector<8x1xf32>
    %22 = vector.broadcast %21 : vector<8x1xf32> to vector<8x128xf32>
    %23 = arith.subf %19, %22 : vector<8x128xf32>
    %24 = math.exp %23 : vector<8x128xf32>
    %cst_18 = arith.constant dense<0.000000e+00> : vector<8xf32>
    %25 = vector.multi_reduction <add>, %24, %cst_18 [1] : vector<8x128xf32> to vector<8xf32>
    %26 = vector.shape_cast %25 : vector<8xf32> to vector<8x1xf32>
    %c0_19 = arith.constant 0 : index
    %c0_20 = arith.constant 0 : index
    %27 = vector.load %arg8[%c0_19, %c0_20] : memref<128x32xf32, #tpu.memory_space<vmem>>, vector<128x32xf32>
    %cst_21 = arith.constant dense<0.000000e+00> : vector<8x32xf32>
    %28 = tpu.matmul %24, %27, %cst_21 {dimension_numbers = #tpu.dot_dimension_numbers<[1], [0], [0], [1], [0, 0, 1, 1], [], []>} : vector<8x128xf32>, vector<128x32xf32>, vector<8x32xf32> -> vector<8x32xf32>
    %29 = vector.broadcast %26 : vector<8x1xf32> to vector<8x32xf32>
    %30 = arith.divf %28, %29 : vector<8x32xf32>
    %c0_22 = arith.constant 0 : index
    %c0_23 = arith.constant 0 : index
    %31 = vector.load %arg9[%c0_22, %c0_23] : memref<8x32xf32, #tpu.memory_space<vmem>>, vector<8x32xf32>
    tpu.vector_store %arg9[%c0_22, %c0_23], %30 {strides = array<i32>} : memref<8x32xf32, #tpu.memory_space<vmem>>, vector<8x32xf32>,
    return
  }
  func.func @transform_0(%arg0: i32) -> (i32, i32) {
    %c0_i32 = arith.constant 0 : i32
    %c0_i32_0 = arith.constant 0 : i32
    return %arg0, %c0_i32 : i32, i32
  }
  func.func @transform_1(%arg0: i32) -> (i32, i32) {
    %c0_i32 = arith.constant 0 : i32
    %c0_i32_0 = arith.constant 0 : i32
    %c0_i32_1 = arith.constant 0 : i32
    return %c0_i32, %c0_i32_0 : i32, i32
  }
  func.func @transform_2(%arg0: i32) -> (i32, i32) {
    %c0_i32 = arith.constant 0 : i32
    %c0_i32_0 = arith.constant 0 : i32
    %c0_i32_1 = arith.constant 0 : i32
    return %c0_i32, %c0_i32_0 : i32, i32
  }
  func.func @transform_3(%arg0: i32) -> (i32, i32) {
    %c0_i32 = arith.constant 0 : i32
    %c0_i32_0 = arith.constant 0 : i32
    %c0_i32_1 = arith.constant 0 : i32
    return %c0_i32, %c0_i32_0 : i32, i32
  }
  func.func @transform_4(%arg0: i32) -> (i32, i32) {
    %c0_i32 = arith.constant 0 : i32
    %c0_i32_0 = arith.constant 0 : i32
    %c0_i32_1 = arith.constant 0 : i32
    return %c0_i32, %c0_i32_0 : i32, i32
  }
  func.func @transform_5(%arg0: i32) -> (i32, i32) {
    %c0_i32 = arith.constant 0 : i32
    %c0_i32_0 = arith.constant 0 : i32
    %c0_i32_1 = arith.constant 0 : i32
    return %c0_i32, %c0_i32_0 : i32, i32
  }
  func.func @transform_6(%arg0: i32) -> (i32, i32) {
    %c0_i32 = arith.constant 0 : i32
    %c0_i32_0 = arith.constant 0 : i32
    %c0_i32_1 = arith.constant 0 : i32
    return %c0_i32, %c0_i32_0 : i32, i32
  }
  func.func @transform_7(%arg0: i32) -> (i32, i32) {
    %c0_i32 = arith.constant 0 : i32
    %c0_i32_0 = arith.constant 0 : i32
    %c0_i32_1 = arith.constant 0 : i32
    return %c0_i32, %c0_i32_0 : i32, i32
  }
  func.func @transform_8(%arg0: i32) -> (i32, i32) {
    %c0_i32 = arith.constant 0 : i32
    %c0_i32_0 = arith.constant 0 : i32
    return %arg0, %c0_i32 : i32, i32
  }
}

</mosaic_0001>

<llo_original>
// kernel: tpu_custom_call.1
$region0: #{tpu_custom_call.1}
  #allocation0 [shape = 'u32[]', space=smem, size = 0x4, offset = 0x4, fixed_abs, tag = 'smem constant byte address 0x4 - core index']
  #allocation1 [shape = 'u32[72,128]{1,0:T(1,128)}', space=vmem, size = 0x9000, scoped, tag = 'internal scratch']
  %s0 = inlined_call_operand.hbm [shape: f32[8,32], index: 0, kind: input, shape index: {}]
  %s1 = inlined_call_operand.vmem [shape: f32[32,128], index: 1, kind: input, shape index: {}]
  %s2 = inlined_call_operand.vmem [shape: f32[1,128], index: 2, kind: input, shape index: {}]
  %s3 = inlined_call_operand.vmem [shape: f32[128,128], index: 3, kind: input, shape index: {}]
  %s4 = inlined_call_operand.vmem [shape: f32[1,128], index: 4, kind: input, shape index: {}]
  %s5 = inlined_call_operand.hbm [shape: f32[128,128], index: 5, kind: input, shape index: {}]
  %s6 = inlined_call_operand.vmem [shape: f32[1,128], index: 6, kind: input, shape index: {}]
  %s7 = inlined_call_operand.vmem [shape: f32[128,32], index: 7, kind: input, shape index: {}]
  %s8 = inlined_call_operand.hbm [shape: f32[8,32], index: 8, kind: output, shape index: {}]
  %s9 = sld [smem:[#allocation0]]
  $region50: #{tpu_custom_call.1} parent=0
    _
  %s11 = ssub.s32 1, %s9
  %s12 = scalar_select 0, %s11, %s9
  $region1: #{tpu_custom_call.1} parent=0
    #allocation2 [shape = 'u8[4096]{0}', space=vmem, size = 0x1000, scoped, tag = 'input window, operand 0, single buffered']
    #allocation3 [shape = 's32[1]{0}', space=sflag, size = 0x4, scoped, tag = 'scoped memory for tpu_custom_call.1']
    #allocation4 [shape = 's32[1]{0}', space=sflag, size = 0x4, scoped, tag = 'scoped memory for tpu_custom_call.1']
    #allocation5 [shape = 'u8[65536]{0}', space=vmem, size = 0x10000, scoped, tag = 'input window, operand 5, single buffered']
    #allocation6 [shape = 's32[1]{0}', space=sflag, size = 0x4, scoped, tag = 'scoped memory for tpu_custom_call.1']
    #allocation7 [shape = 'u8[4096]{0}', space=vmem, size = 0x1000, scoped, tag = 'output window, operand 0, single buffered']
    %13 = vsyncpa [#allocation3], 0
    %14 = vsyncpa [#allocation6], 0
    %15 = vsyncpa [#allocation4], 0
    // Predicated region
    $region2: #{tpu_custom_call.1} parent=1 // pred_check
      _
    $region3: #{tpu_custom_call.1} parent=1 // pred_check_branch
      %17 = sbr.rel (0) target = $region5
    $region4: #{tpu_custom_call.1} parent=1 // pred_region
      %19 = vsyncadd [#allocation3], 0
      %s21 = sshll.u32 %s0, 4
      %s22 = int_to_ptr.hbm [resolvable:$true] %s21
      %s23 = sshll.u32 [#allocation2], 4
      %s24 = int_to_ptr.vmem [resolvable:$true] %s23
      %26 = dma.hbm_to_vmem [thread:$0]  %s22, 128, %s24, [#allocation3]
    $region5: #{tpu_custom_call.1} parent=1 // pred_fallthru
      _
    // Predicated region
    $region6: #{tpu_custom_call.1} parent=1 // pred_check
      _
    $region7: #{tpu_custom_call.1} parent=1 // pred_check_branch
      %28 = sbr.rel (0) target = $region9
    $region8: #{tpu_custom_call.1} parent=1 // pred_region
      _
    $region9: #{tpu_custom_call.1} parent=1 // pred_fallthru
      _
    // Predicated region
    $region10: #{tpu_custom_call.1} parent=1 // pred_check
      _
    $region11: #{tpu_custom_call.1} parent=1 // pred_check_branch
      %30 = sbr.rel (0) target = $region13
    $region12: #{tpu_custom_call.1} parent=1 // pred_region
      _
    $region13: #{tpu_custom_call.1} parent=1 // pred_fallthru
      _
    // Predicated region
    $region14: #{tpu_custom_call.1} parent=1 // pred_check
      _
    $region15: #{tpu_custom_call.1} parent=1 // pred_check_branch
      %32 = sbr.rel (0) target = $region17
    $region16: #{tpu_custom_call.1} parent=1 // pred_region
      _
    $region17: #{tpu_custom_call.1} parent=1 // pred_fallthru
      _
    // Predicated region
    $region18: #{tpu_custom_call.1} parent=1 // pred_check
      _
    $region19: #{tpu_custom_call.1} parent=1 // pred_check_branch
      %34 = sbr.rel (0) target = $region21
    $region20: #{tpu_custom_call.1} parent=1 // pred_region
      _
    $region21: #{tpu_custom_call.1} parent=1 // pred_fallthru
      _
    // Predicated region
    $region22: #{tpu_custom_call.1} parent=1 // pred_check
      _
    $region23: #{tpu_custom_call.1} parent=1 // pred_check_branch
      %36 = sbr.rel (0) target = $region25
    $region24: #{tpu_custom_call.1} parent=1 // pred_region
      %38 = vsyncadd [#allocation6], 0
      %s39 = sshll.u32 %s5, 4
      %s40 = int_to_ptr.hbm [resolvable:$true] %s39
      %s41 = sshll.u32 [#allocation5], 4
      %s42 = int_to_ptr.vmem [resolvable:$true] %s41
      %47 = dma.hbm_to_vmem [thread:$0]  %s40, 2048, %s42, [#allocation6], 128, 128, 8
    $region25: #{tpu_custom_call.1} parent=1 // pred_fallthru
      _
    // Predicated region
    $region26: #{tpu_custom_call.1} parent=1 // pred_check
      _
    $region27: #{tpu_custom_call.1} parent=1 // pred_check_branch
      %49 = sbr.rel (0) target = $region29
    $region28: #{tpu_custom_call.1} parent=1 // pred_region
      _
    $region29: #{tpu_custom_call.1} parent=1 // pred_fallthru
      _
    // Predicated region
    $region30: #{tpu_custom_call.1} parent=1 // pred_check
      _
    $region31: #{tpu_custom_call.1} parent=1 // pred_check_branch
      %51 = sbr.rel (0) target = $region33
    $region32: #{tpu_custom_call.1} parent=1 // pred_region
      _
    $region33: #{tpu_custom_call.1} parent=1 // pred_fallthru
      _
    // Predicated region
    $region34: #{tpu_custom_call.1} parent=1 // pred_check
      _
    $region35: #{tpu_custom_call.1} parent=1 // pred_check_branch
      %53 = sbr.rel (0) target = $region37
    $region36: #{tpu_custom_call.1} parent=1 // pred_region
      %55 = dma.done [#allocation3], 128
    $region37: #{tpu_custom_call.1} parent=1 // pred_fallthru
      _
    // Predicated region
    $region38: #{tpu_custom_call.1} parent=1 // pred_check
      _
    $region39: #{tpu_custom_call.1} parent=1 // pred_check_branch
      %57 = sbr.rel (0) target = $region41
    $region40: #{tpu_custom_call.1} parent=1 // pred_region
      %59 = dma.done [#allocation6], 2048
    $region41: #{tpu_custom_call.1} parent=1 // pred_fallthru
      _
    %v60 = vld [vmem:[#allocation2] sm:$0xff]
    %v61 = vld [vmem:[%s1] sm:$0xff]
    %v62 = vld [vmem:[%s1 + $0x8] sm:$0xff]
    %v63 = vld [vmem:[%s1 + $0x10] sm:$0xff]
    %v64 = vld [vmem:[%s1 + $0x18] sm:$0xff]
    %v65 = vld [vmem:[%s2] sm:$0x1]
    %v67 = vperm.slane %v65, 0
    %vm69 = vcmask 261120
    %v71 = vsel %vm69, %v60, 0
    %73 = vmatpush.msra.mxu0 0.0
    %74 = vmatpush.msra.mxu0 0.0
    %75 = vmatpush.msra.mxu0 0.0
    %76 = vmatpush.msra.mxu0 0.0
    %77 = vmatpush.msra.mxu0 0.0
    %78 = vmatpush.msra.mxu0 0.0
    %79 = vmatpush.msra.mxu0 0.0
    %80 = vmatpush.msra.mxu0 0.0
    %81 = vmatpush.msra.mxu0 0.0
    %82 = vmatpush.msra.mxu0 0.0
    %83 = vmatpush.msra.mxu0 0.0
    %84 = vmatpush.msra.mxu0 0.0
    %85 = vmatpush.msra.mxu0 %v64
    %86 = vmatpush.msra.mxu0 %v63
    %87 = vmatpush.msra.mxu0 %v62
    %88 = vmatpush.msra.mxu0 %v61
    %89 = vmatmul.f32.gmra.mxu0 %v71
    %v90 = vpop.f32.mrf.mxu0
    %v91 = vadd.f32 %v67, %v90
    %92 = vdwg.mxu0
    %v93 = vmax.f32 %v91, 0.0
    %v94 = vld [vmem:[%s3] sm:$0xff]
    %v95 = vld [vmem:[%s3 + $0x8] sm:$0xff]
    %v96 = vld [vmem:[%s3 + $0x10] sm:$0xff]
    %v97 = vld [vmem:[%s3 + $0x18] sm:$0xff]
    %v98 = vld [vmem:[%s3 + $0x20] sm:$0xff]
    %v99 = vld [vmem:[%s3 + $0x28] sm:$0xff]
    %v100 = vld [vmem:[%s3 + $0x30] sm:$0xff]
    %v101 = vld [vmem:[%s3 + $0x38] sm:$0xff]
    %v102 = vld [vmem:[%s3 + $0x40] sm:$0xff]
    %v103 = vld [vmem:[%s3 + $0x48] sm:$0xff]
    %v104 = vld [vmem:[%s3 + $0x50] sm:$0xff]
    %v105 = vld [vmem:[%s3 + $0x58] sm:$0xff]
    %v106 = vld [vmem:[%s3 + $0x60] sm:$0xff]
    %v107 = vld [vmem:[%s3 + $0x68] sm:$0xff]
    %v108 = vld [vmem:[%s3 + $0x70] sm:$0xff]
    %v109 = vld [vmem:[%s3 + $0x78] sm:$0xff]
    %v110 = vld [vmem:[%s4] sm:$0x1]
    %v112 = vperm.slane %v110, 0
    %114 = vmatpush.msra.mxu0 %v109
    %115 = vmatpush.msra.mxu0 %v108
    %116 = vmatpush.msra.mxu0 %v107
    %117 = vmatpush.msra.mxu0 %v106
    %118 = vmatpush.msra.mxu0 %v105
    %119 = vmatpush.msra.mxu0 %v104
    %120 = vmatpush.msra.mxu0 %v103
    %121 = vmatpush.msra.mxu0 %v102
    %122 = vmatpush.msra.mxu0 %v101
    %123 = vmatpush.msra.mxu0 %v100
    %124 = vmatpush.msra.mxu0 %v99
    %125 = vmatpush.msra.mxu0 %v98
    %126 = vmatpush.msra.mxu0 %v97
    %127 = vmatpush.msra.mxu0 %v96
    %128 = vmatpush.msra.mxu0 %v95
    %129 = vmatpush.msra.mxu0 %v94
    %130 = vmatmul.f32.gmra.mxu0 %v93
    %v131 = vpop.f32.mrf.mxu0
    %v132 = vadd.f32 %v112, %v131
    %133 = vdwg.mxu0
    %v134 = vmax.f32 %v132, 0.0
    %v135 = vld [vmem:[#allocation5] sm:$0xff]
    %v136 = vld [vmem:[#allocation5 + $0x8] sm:$0xff]
    %v137 = vld [vmem:[#allocation5 + $0x10] sm:$0xff]
    %v138 = vld [vmem:[#allocation5 + $0x18] sm:$0xff]
    %v139 = vld [vmem:[#allocation5 + $0x20] sm:$0xff]
    %v140 = vld [vmem:[#allocation5 + $0x28] sm:$0xff]
    %v141 = vld [vmem:[#allocation5 + $0x30] sm:$0xff]
    %v142 = vld [vmem:[#allocation5 + $0x38] sm:$0xff]
    %v143 = vld [vmem:[#allocation5 + $0x40] sm:$0xff]
    %v144 = vld [vmem:[#allocation5 + $0x48] sm:$0xff]
    %v145 = vld [vmem:[#allocation5 + $0x50] sm:$0xff]
    %v146 = vld [vmem:[#allocation5 + $0x58] sm:$0xff]
    %v147 = vld [vmem:[#allocation5 + $0x60] sm:$0xff]
    %v148 = vld [vmem:[#allocation5 + $0x68] sm:$0xff]
    %v149 = vld [vmem:[#allocation5 + $0x70] sm:$0xff]
    %v150 = vld [vmem:[#allocation5 + $0x78] sm:$0xff]
    %v151 = vld [vmem:[%s6] sm:$0x1]
    %v153 = vperm.slane %v151, 0
    %155 = vmatpush.msra.mxu0 %v150
    %156 = vmatpush.msra.mxu0 %v149
    %157 = vmatpush.msra.mxu0 %v148
    %158 = vmatpush.msra.mxu0 %v147
    %159 = vmatpush.msra.mxu0 %v146
    %160 = vmatpush.msra.mxu0 %v145
    %161 = vmatpush.msra.mxu0 %v144
    %162 = vmatpush.msra.mxu0 %v143
    %163 = vmatpush.msra.mxu0 %v142
    %164 = vmatpush.msra.mxu0 %v141
    %165 = vmatpush.msra.mxu0 %v140
    %166 = vmatpush.msra.mxu0 %v139
    %167 = vmatpush.msra.mxu0 %v138
    %168 = vmatpush.msra.mxu0 %v137
    %169 = vmatpush.msra.mxu0 %v136
    %170 = vmatpush.msra.mxu0 %v135
    %171 = vmatmul.f32.gmra.mxu0 %v134
    %v172 = vpop.f32.mrf.mxu0
    %v173 = vadd.f32 %v153, %v172
    %174 = vdwg.mxu0
    %175 = vmax.xlane.f32.xlu0 %v173
    %v176 = vpop.xlane.xlu0 %175
    %v177 = vsub.f32 %v173, %v176
    %v178 = vmul.f32 %v177, 1.442695
    %v179 = vpow.pop %v178
    %180 = vadd.xlane.f32.xlu0 %v179
    %v181 = vpop.xlane.xlu0 %180
    %v182 = vld [vmem:[%s7] sm:$0xff]
    %v183 = vld [vmem:[%s7 + $0x8] sm:$0xff]
    %v184 = vld [vmem:[%s7 + $0x10] sm:$0xff]
    %v185 = vld [vmem:[%s7 + $0x18] sm:$0xff]
    %v186 = vld [vmem:[%s7 + $0x20] sm:$0xff]
    %v187 = vld [vmem:[%s7 + $0x28] sm:$0xff]
    %v188 = vld [vmem:[%s7 + $0x30] sm:$0xff]
    %v189 = vld [vmem:[%s7 + $0x38] sm:$0xff]
    %v190 = vld [vmem:[%s7 + $0x40] sm:$0xff]
    %v191 = vld [vmem:[%s7 + $0x48] sm:$0xff]
    %v192 = vld [vmem:[%s7 + $0x50] sm:$0xff]
    %v193 = vld [vmem:[%s7 + $0x58] sm:$0xff]
    %v194 = vld [vmem:[%s7 + $0x60] sm:$0xff]
    %v195 = vld [vmem:[%s7 + $0x68] sm:$0xff]
    %v196 = vld [vmem:[%s7 + $0x70] sm:$0xff]
    %v197 = vld [vmem:[%s7 + $0x78] sm:$0xff]
    %198 = vmatpush.msra.mxu0 %v197
    %199 = vmatpush.msra.mxu0 %v196
    %200 = vmatpush.msra.mxu0 %v195
    %201 = vmatpush.msra.mxu0 %v194
    %202 = vmatpush.msra.mxu0 %v193
    %203 = vmatpush.msra.mxu0 %v192
    %204 = vmatpush.msra.mxu0 %v191
    %205 = vmatpush.msra.mxu0 %v190
    %206 = vmatpush.msra.mxu0 %v189
    %207 = vmatpush.msra.mxu0 %v188
    %208 = vmatpush.msra.mxu0 %v187
    %209 = vmatpush.msra.mxu0 %v186
    %210 = vmatpush.msra.mxu0 %v185
    %211 = vmatpush.msra.mxu0 %v184
    %212 = vmatpush.msra.mxu0 %v183
    %213 = vmatpush.msra.mxu0 %v182
    %214 = vmatmul.f32.gmra.mxu0 %v179
    %v215 = vpop.f32.mrf.mxu0
    %v216 = vadd.f32 0.0, %v215
    %217 = vdwg.mxu0
    %v218 = vrcp.pop %v181
    %v219 = vmul.f32 %v181, %v218
    %v220 = vsub.f32 1.0, %v219
    %v221 = vmul.f32 %v218, %v220
    %v222 = vadd.f32 %v218, %v221
    %vm223 = vweird.f32 %v181
    %vm224 = vweird.f32 %v218
    %vm225 = vmor %vm223, %vm224
    %v226 = vsel %vm225, %v218, %v222
    %v227 = vand.u32 2147483647, %v181
    %vm228 = vcmp.eq.f32.partialorder %v227, 8.507059e+37
    %v229 = vand.u32 %v181, 2147483648
    %v230 = vor.u32 1.1754944e-38, %v229
    %v231 = vsel %vm228, %v230, %v226
    %v232 = vmul.f32 %v216, %v231
    %233 = vst.msk [vmem:[#allocation7] sm:$0xff] %vm69, %v232
    // Predicated region
    $region42: #{tpu_custom_call.1} parent=1 // pred_check
      _
    $region43: #{tpu_custom_call.1} parent=1 // pred_check_branch
      %235 = sbr.rel (0) target = $region45
    $region44: #{tpu_custom_call.1} parent=1 // pred_region
      %237 = vsyncadd [#allocation4], 0
      %s239 = sshll.u32 [#allocation7], 4
      %s240 = int_to_ptr.vmem [resolvable:$true] %s239
      %s241 = sshll.u32 %s8, 4
      %s242 = int_to_ptr.hbm [resolvable:$true] %s241
      %244 = dma.vmem_to_hbm [thread:$0]  %s240, 128, %s242, [#allocation4]
    $region45: #{tpu_custom_call.1} parent=1 // pred_fallthru
      _
    // Predicated region
    $region46: #{tpu_custom_call.1} parent=1 // pred_check
      _
    $region47: #{tpu_custom_call.1} parent=1 // pred_check_branch
      %246 = sbr.rel (0) target = $region49
    $region48: #{tpu_custom_call.1} parent=1 // pred_region
      %248 = dma.done [#allocation4], 128
    $region49: #{tpu_custom_call.1} parent=1 // pred_fallthru
      _
    %249 = vsyncpa [#allocation3], 1
    %250 = vsyncpa [#allocation6], 1
    %251 = vsyncpa [#allocation4], 1

// kernel: tpu_custom_call.1
$region0: #{tpu_custom_call.1}
  #allocation0 [shape = 'u32[]', space=smem, size = 0x4, offset = 0x4, fixed_abs, tag = 'smem constant byte address 0x4 - core index']
  #allocation1 [shape = 'u32[72,128]{1,0:T(1,128)}', space=vmem, size = 0x9000, scoped, tag = 'internal scratch']
  %s0 = inlined_call_operand.hbm [shape: f32[8,32], index: 0, kind: input, shape index: {}]
  %s1 = inlined_call_operand.vmem [shape: f32[32,128], index: 1, kind: input, shape index: {}]
  %s2 = inlined_call_operand.vmem [shape: f32[1,128], index: 2, kind: input, shape index: {}]
  %s3 = inlined_call_operand.vmem [shape: f32[128,128], index: 3, kind: input, shape index: {}]
  %s4 = inlined_call_operand.vmem [shape: f32[1,128], index: 4, kind: input, shape index: {}]
  %s5 = inlined_call_operand.hbm [shape: f32[128,128], index: 5, kind: input, shape index: {}]
  %s6 = inlined_call_operand.vmem [shape: f32[1,128], index: 6, kind: input, shape index: {}]
  %s7 = inlined_call_operand.vmem [shape: f32[128,32], index: 7, kind: input, shape index: {}]
  %s8 = inlined_call_operand.hbm [shape: f32[8,32], index: 8, kind: output, shape index: {}]
  %s9 = sld [smem:[#allocation0]]
  $region50: #{tpu_custom_call.1} parent=0
    _
  %s11 = ssub.s32 1, %s9
  %s12 = scalar_select 0, %s11, %s9
  $region1: #{tpu_custom_call.1} parent=0
    #allocation2 [shape = 'u8[4096]{0}', space=vmem, size = 0x1000, scoped, tag = 'input window, operand 0, single buffered']
    #allocation3 [shape = 's32[1]{0}', space=sflag, size = 0x4, scoped, tag = 'scoped memory for tpu_custom_call.1']
    #allocation4 [shape = 's32[1]{0}', space=sflag, size = 0x4, scoped, tag = 'scoped memory for tpu_custom_call.1']
    #allocation5 [shape = 'u8[65536]{0}', space=vmem, size = 0x10000, scoped, tag = 'input window, operand 5, single buffered']
    #allocation6 [shape = 's32[1]{0}', space=sflag, size = 0x4, scoped, tag = 'scoped memory for tpu_custom_call.1']
    #allocation7 [shape = 'u8[4096]{0}', space=vmem, size = 0x1000, scoped, tag = 'output window, operand 0, single buffered']
    %13 = vsyncpa [#allocation3], 0
    %14 = vsyncpa [#allocation6], 0
    %15 = vsyncpa [#allocation4], 0
    // Predicated region
    $region2: #{tpu_custom_call.1} parent=1 // pred_check
      _
    $region3: #{tpu_custom_call.1} parent=1 // pred_check_branch
      %17 = sbr.rel (0) target = $region5
    $region4: #{tpu_custom_call.1} parent=1 // pred_region
      %19 = vsyncadd [#allocation3], 0
      %s21 = sshll.u32 %s0, 4
      %s22 = int_to_ptr.hbm [resolvable:$true] %s21
      %s23 = sshll.u32 [#allocation2], 4
      %s24 = int_to_ptr.vmem [resolvable:$true] %s23
      %26 = dma.hbm_to_vmem [thread:$0]  %s22, 128, %s24, [#allocation3]
    $region5: #{tpu_custom_call.1} parent=1 // pred_fallthru
      _
    // Predicated region
    $region6: #{tpu_custom_call.1} parent=1 // pred_check
      _
    $region7: #{tpu_custom_call.1} parent=1 // pred_check_branch
      %28 = sbr.rel (0) target = $region9
    $region8: #{tpu_custom_call.1} parent=1 // pred_region
      _
    $region9: #{tpu_custom_call.1} parent=1 // pred_fallthru
      _
    // Predicated region
    $region10: #{tpu_custom_call.1} parent=1 // pred_check
      _
    $region11: #{tpu_custom_call.1} parent=1 // pred_check_branch
      %30 = sbr.rel (0) target = $region13
    $region12: #{tpu_custom_call.1} parent=1 // pred_region
      _
    $region13: #{tpu_custom_call.1} parent=1 // pred_fallthru
      _
    // Predicated region
    $region14: #{tpu_custom_call.1} parent=1 // pred_check
      _
    $region15: #{tpu_custom_call.1} parent=1 // pred_check_branch
      %32 = sbr.rel (0) target = $region17
    $region16: #{tpu_custom_call.1} parent=1 // pred_region
      _
    $region17: #{tpu_custom_call.1} parent=1 // pred_fallthru
      _
    // Predicated region
    $region18: #{tpu_custom_call.1} parent=1 // pred_check
      _
    $region19: #{tpu_custom_call.1} parent=1 // pred_check_branch
      %34 = sbr.rel (0) target = $region21
    $region20: #{tpu_custom_call.1} parent=1 // pred_region
      _
    $region21: #{tpu_custom_call.1} parent=1 // pred_fallthru
      _
    // Predicated region
    $region22: #{tpu_custom_call.1} parent=1 // pred_check
      _
    $region23: #{tpu_custom_call.1} parent=1 // pred_check_branch
      %36 = sbr.rel (0) target = $region25
    $region24: #{tpu_custom_call.1} parent=1 // pred_region
      %38 = vsyncadd [#allocation6], 0
      %s39 = sshll.u32 %s5, 4
      %s40 = int_to_ptr.hbm [resolvable:$true] %s39
      %s41 = sshll.u32 [#allocation5], 4
      %s42 = int_to_ptr.vmem [resolvable:$true] %s41
      %47 = dma.hbm_to_vmem [thread:$0]  %s40, 2048, %s42, [#allocation6], 128, 128, 8
    $region25: #{tpu_custom_call.1} parent=1 // pred_fallthru
      _
    // Predicated region
    $region26: #{tpu_custom_call.1} parent=1 // pred_check
      _
    $region27: #{tpu_custom_call.1} parent=1 // pred_check_branch
      %49 = sbr.rel (0) target = $region29
    $region28: #{tpu_custom_call.1} parent=1 // pred_region
      _
    $region29: #{tpu_custom_call.1} parent=1 // pred_fallthru
      _
    // Predicated region
    $region30: #{tpu_custom_call.1} parent=1 // pred_check
      _
    $region31: #{tpu_custom_call.1} parent=1 // pred_check_branch
      %51 = sbr.rel (0) target = $region33
    $region32: #{tpu_custom_call.1} parent=1 // pred_region
      _
    $region33: #{tpu_custom_call.1} parent=1 // pred_fallthru
      _
    // Predicated region
    $region34: #{tpu_custom_call.1} parent=1 // pred_check
      _
    $region35: #{tpu_custom_call.1} parent=1 // pred_check_branch
      %53 = sbr.rel (0) target = $region37
    $region36: #{tpu_custom_call.1} parent=1 // pred_region
      %55 = dma.done [#allocation3], 128
    $region37: #{tpu_custom_call.1} parent=1 // pred_fallthru
      _
    // Predicated region
    $region38: #{tpu_custom_call.1} parent=1 // pred_check
      _
    $region39: #{tpu_custom_call.1} parent=1 // pred_check_branch
      %57 = sbr.rel (0) target = $region41
    $region40: #{tpu_custom_call.1} parent=1 // pred_region
      %59 = dma.done [#allocation6], 2048
    $region41: #{tpu_custom_call.1} parent=1 // pred_fallthru
      _
    %v60 = vld [vmem:[#allocation2] sm:$0xff]
    %v61 = vld [vmem:[%s1] sm:$0xff]
    %v62 = vld [vmem:[%s1 + $0x8] sm:$0xff]
    %v63 = vld [vmem:[%s1 + $0x10] sm:$0xff]
    %v64 = vld [vmem:[%s1 + $0x18] sm:$0xff]
    %v65 = vld [vmem:[%s2] sm:$0x1]
    %v67 = vperm.slane %v65, 0
    %vm69 = vcmask 261120
    %v71 = vsel %vm69, %v60, 0
    %73 = vmatpush.msra.mxu0 0.0
    %74 = vmatpush.msra.mxu0 0.0
    %75 = vmatpush.msra.mxu0 0.0
    %76 = vmatpush.msra.mxu0 0.0
    %77 = vmatpush.msra.mxu0 0.0
    %78 = vmatpush.msra.mxu0 0.0
    %79 = vmatpush.msra.mxu0 0.0
    %80 = vmatpush.msra.mxu0 0.0
    %81 = vmatpush.msra.mxu0 0.0
    %82 = vmatpush.msra.mxu0 0.0
    %83 = vmatpush.msra.mxu0 0.0
    %84 = vmatpush.msra.mxu0 0.0
    %85 = vmatpush.msra.mxu0 %v64
    %86 = vmatpush.msra.mxu0 %v63
    %87 = vmatpush.msra.mxu0 %v62
    %88 = vmatpush.msra.mxu0 %v61
    %89 = vmatmul.f32.gmra.mxu0 %v71
    %v90 = vpop.f32.mrf.mxu0
    %v91 = vadd.f32 %v67, %v90
    %92 = vdwg.mxu0
    %v93 = vmax.f32 %v91, 0.0
    %v94 = vld [vmem:[%s3] sm:$0xff]
    %v95 = vld [vmem:[%s3 + $0x8] sm:$0xff]
    %v96 = vld [vmem:[%s3 + $0x10] sm:$0xff]
    %v97 = vld [vmem:[%s3 + $0x18] sm:$0xff]
    %v98 = vld [vmem:[%s3 + $0x20] sm:$0xff]
    %v99 = vld [vmem:[%s3 + $0x28] sm:$0xff]
    %v100 = vld [vmem:[%s3 + $0x30] sm:$0xff]
    %v101 = vld [vmem:[%s3 + $0x38] sm:$0xff]
    %v102 = vld [vmem:[%s3 + $0x40] sm:$0xff]
    %v103 = vld [vmem:[%s3 + $0x48] sm:$0xff]
    %v104 = vld [vmem:[%s3 + $0x50] sm:$0xff]
    %v105 = vld [vmem:[%s3 + $0x58] sm:$0xff]
    %v106 = vld [vmem:[%s3 + $0x60] sm:$0xff]
    %v107 = vld [vmem:[%s3 + $0x68] sm:$0xff]
    %v108 = vld [vmem:[%s3 + $0x70] sm:$0xff]
    %v109 = vld [vmem:[%s3 + $0x78] sm:$0xff]
    %v110 = vld [vmem:[%s4] sm:$0x1]
    %v112 = vperm.slane %v110, 0
    %114 = vmatpush.msra.mxu0 %v109
    %115 = vmatpush.msra.mxu0 %v108
    %116 = vmatpush.msra.mxu0 %v107
    %117 = vmatpush.msra.mxu0 %v106
    %118 = vmatpush.msra.mxu0 %v105
    %119 = vmatpush.msra.mxu0 %v104
    %120 = vmatpush.msra.mxu0 %v103
    %121 = vmatpush.msra.mxu0 %v102
    %122 = vmatpush.msra.mxu0 %v101
    %123 = vmatpush.msra.mxu0 %v100
    %124 = vmatpush.msra.mxu0 %v99
    %125 = vmatpush.msra.mxu0 %v98
    %126 = vmatpush.msra.mxu0 %v97
    %127 = vmatpush.msra.mxu0 %v96
    %128 = vmatpush.msra.mxu0 %v95
    %129 = vmatpush.msra.mxu0 %v94
    %130 = vmatmul.f32.gmra.mxu0 %v93
    %v131 = vpop.f32.mrf.mxu0
    %v132 = vadd.f32 %v112, %v131
    %133 = vdwg.mxu0
    %v134 = vmax.f32 %v132, 0.0
    %v135 = vld [vmem:[#allocation5] sm:$0xff]
    %v136 = vld [vmem:[#allocation5 + $0x8] sm:$0xff]
    %v137 = vld [vmem:[#allocation5 + $0x10] sm:$0xff]
    %v138 = vld [vmem:[#allocation5 + $0x18] sm:$0xff]
    %v139 = vld [vmem:[#allocation5 + $0x20] sm:$0xff]
    %v140 = vld [vmem:[#allocation5 + $0x28] sm:$0xff]
    %v141 = vld [vmem:[#allocation5 + $0x30] sm:$0xff]
    %v142 = vld [vmem:[#allocation5 + $0x38] sm:$0xff]
    %v143 = vld [vmem:[#allocation5 + $0x40] sm:$0xff]
    %v144 = vld [vmem:[#allocation5 + $0x48] sm:$0xff]
    %v145 = vld [vmem:[#allocation5 + $0x50] sm:$0xff]
    %v146 = vld [vmem:[#allocation5 + $0x58] sm:$0xff]
    %v147 = vld [vmem:[#allocation5 + $0x60] sm:$0xff]
    %v148 = vld [vmem:[#allocation5 + $0x68] sm:$0xff]
    %v149 = vld [vmem:[#allocation5 + $0x70] sm:$0xff]
    %v150 = vld [vmem:[#allocation5 + $0x78] sm:$0xff]
    %v151 = vld [vmem:[%s6] sm:$0x1]
    %v153 = vperm.slane %v151, 0
    %155 = vmatpush.msra.mxu0 %v150
    %156 = vmatpush.msra.mxu0 %v149
    %157 = vmatpush.msra.mxu0 %v148
    %158 = vmatpush.msra.mxu0 %v147
    %159 = vmatpush.msra.mxu0 %v146
    %160 = vmatpush.msra.mxu0 %v145
    %161 = vmatpush.msra.mxu0 %v144
    %162 = vmatpush.msra.mxu0 %v143
    %163 = vmatpush.msra.mxu0 %v142
    %164 = vmatpush.msra.mxu0 %v141
    %165 = vmatpush.msra.mxu0 %v140
    %166 = vmatpush.msra.mxu0 %v139
    %167 = vmatpush.msra.mxu0 %v138
    %168 = vmatpush.msra.mxu0 %v137
    %169 = vmatpush.msra.mxu0 %v136
    %170 = vmatpush.msra.mxu0 %v135
    %171 = vmatmul.f32.gmra.mxu0 %v134
    %v172 = vpop.f32.mrf.mxu0
    %v173 = vadd.f32 %v153, %v172
    %174 = vdwg.mxu0
    %175 = vmax.xlane.f32.xlu0 %v173
    %v176 = vpop.xlane.xlu0 %175
    %v177 = vsub.f32 %v173, %v176
    %v178 = vmul.f32 %v177, 1.442695
    %v179 = vpow.pop %v178
    %180 = vadd.xlane.f32.xlu0 %v179
    %v181 = vpop.xlane.xlu0 %180
    %v182 = vld [vmem:[%s7] sm:$0xff]
    %v183 = vld [vmem:[%s7 + $0x8] sm:$0xff]
    %v184 = vld [vmem:[%s7 + $0x10] sm:$0xff]
    %v185 = vld [vmem:[%s7 + $0x18] sm:$0xff]
    %v186 = vld [vmem:[%s7 + $0x20] sm:$0xff]
    %v187 = vld [vmem:[%s7 + $0x28] sm:$0xff]
    %v188 = vld [vmem:[%s7 + $0x30] sm:$0xff]
    %v189 = vld [vmem:[%s7 + $0x38] sm:$0xff]
    %v190 = vld [vmem:[%s7 + $0x40] sm:$0xff]
    %v191 = vld [vmem:[%s7 + $0x48] sm:$0xff]
    %v192 = vld [vmem:[%s7 + $0x50] sm:$0xff]
    %v193 = vld [vmem:[%s7 + $0x58] sm:$0xff]
    %v194 = vld [vmem:[%s7 + $0x60] sm:$0xff]
    %v195 = vld [vmem:[%s7 + $0x68] sm:$0xff]
    %v196 = vld [vmem:[%s7 + $0x70] sm:$0xff]
    %v197 = vld [vmem:[%s7 + $0x78] sm:$0xff]
    %198 = vmatpush.msra.mxu0 %v197
    %199 = vmatpush.msra.mxu0 %v196
    %200 = vmatpush.msra.mxu0 %v195
    %201 = vmatpush.msra.mxu0 %v194
    %202 = vmatpush.msra.mxu0 %v193
    %203 = vmatpush.msra.mxu0 %v192
    %204 = vmatpush.msra.mxu0 %v191
    %205 = vmatpush.msra.mxu0 %v190
    %206 = vmatpush.msra.mxu0 %v189
    %207 = vmatpush.msra.mxu0 %v188
    %208 = vmatpush.msra.mxu0 %v187
    %209 = vmatpush.msra.mxu0 %v186
    %210 = vmatpush.msra.mxu0 %v185
    %211 = vmatpush.msra.mxu0 %v184
    %212 = vmatpush.msra.mxu0 %v183
    %213 = vmatpush.msra.mxu0 %v182
    %214 = vmatmul.f32.gmra.mxu0 %v179
    %v215 = vpop.f32.mrf.mxu0
    %v216 = vadd.f32 0.0, %v215
    %217 = vdwg.mxu0
    %v218 = vrcp.pop %v181
    %v219 = vmul.f32 %v181, %v218
    %v220 = vsub.f32 1.0, %v219
    %v221 = vmul.f32 %v218, %v220
    %v222 = vadd.f32 %v218, %v221
    %vm223 = vweird.f32 %v181
    %vm224 = vweird.f32 %v218
    %vm225 = vmor %vm223, %vm224
    %v226 = vsel %vm225, %v218, %v222
    %v227 = vand.u32 2147483647, %v181
    %vm228 = vcmp.eq.f32.partialorder %v227, 8.507059e+37
    %v229 = vand.u32 %v181, 2147483648
    %v230 = vor.u32 1.1754944e-38, %v229
    %v231 = vsel %vm228, %v230, %v226
    %v232 = vmul.f32 %v216, %v231
    %233 = vst.msk [vmem:[#allocation7] sm:$0xff] %vm69, %v232
    // Predicated region
    $region42: #{tpu_custom_call.1} parent=1 // pred_check
      _
    $region43: #{tpu_custom_call.1} parent=1 // pred_check_branch
      %235 = sbr.rel (0) target = $region45
    $region44: #{tpu_custom_call.1} parent=1 // pred_region
      %237 = vsyncadd [#allocation4], 0
      %s239 = sshll.u32 [#allocation7], 4
      %s240 = int_to_ptr.vmem [resolvable:$true] %s239
      %s241 = sshll.u32 %s8, 4
      %s242 = int_to_ptr.hbm [resolvable:$true] %s241
      %244 = dma.vmem_to_hbm [thread:$0]  %s240, 128, %s242, [#allocation4]
    $region45: #{tpu_custom_call.1} parent=1 // pred_fallthru
      _
    // Predicated region
    $region46: #{tpu_custom_call.1} parent=1 // pred_check
      _
    $region47: #{tpu_custom_call.1} parent=1 // pred_check_branch
      %246 = sbr.rel (0) target = $region49
    $region48: #{tpu_custom_call.1} parent=1 // pred_region
      %248 = dma.done [#allocation4], 128
    $region49: #{tpu_custom_call.1} parent=1 // pred_fallthru
      _
    %249 = vsyncpa [#allocation3], 1
    %250 = vsyncpa [#allocation6], 1
    %251 = vsyncpa [#allocation4], 1

</llo_original>
